<compile_context>
chip_gen: v6e
topology: v6e:2x2x1
jax: 0.10.0
libtpu: 0.0.40
codegen_flags: <defaults>
</compile_context>

<pallas_src>
import jax
import jax.numpy as jnp
from jax.experimental import pallas as pl
from jax.experimental.pallas import tpu as pltpu

IN_FEATURES = 256
LENGTH = 128  # "length" hyper-parameter of tg_adapter (lane-aligned)


def tg_adapter_kernel(x_ref, wt_ref, b_ref, p_ref, o_ref):
    # x_ref : (Bt, 256)   chunk of stacked input vectors (row per instance)
    # wt_ref: (256, L)    nn.Linear weight, pre-transposed (resident)
    # b_ref : (1, L)      bias row (resident)
    # p_ref : (1, 1, L)   outer_param row (resident)
    # o_ref : (Bt, L, L)  per-instance outer products
    #
    # Linear on the MXU with a real (M=Bt, K=256, N=L) shape.
    h = jnp.dot(x_ref[...], wt_ref[...], preferred_element_type=jnp.float32)
    h = h + b_ref[...]                       # (Bt, L)
    # torch.outer per instance: out[t, i, j] = h[t, i] * p[j]
    outer = h[:, :, None] * p_ref[...]       # (Bt, L, 1) * (1, 1, L) -> (Bt, L, L)
    # ReLU
    o_ref[...] = jnp.maximum(outer, 0.0).astype(o_ref.dtype)


def tg_adapter_forward_batched(xs, w, b, p, *, block_b=32):
    """Evaluate B independent tg_adapter instances sharing one set of params.

    xs: (B, 256) stacked inputs (one row per instance)
    w : (L, 256) nn.Linear weight (PyTorch layout)
    b : (L,)     nn.Linear bias
    p : (L,)     outer_param
    Returns (B, 1, 1, L, L) float32.
    """
    B = xs.shape[0]
    L = w.shape[0]

    bt = max(1, min(block_b, B))
    b_pad = pl.cdiv(B, bt) * bt
    if b_pad != B:
        xs = jnp.pad(xs, ((0, b_pad - B), (0, 0)))  # padded rows sliced off below

    wt = jnp.transpose(w)          # (256, L) -- one-time transpose outside the kernel
    b_row = b.reshape(1, L)
    p_row = p.reshape(1, 1, L)

    grid = (b_pad // bt,)

    cost = pl.CostEstimate(
        flops=2 * b_pad * IN_FEATURES * L + 2 * b_pad * L * L,
        transcendentals=0,
        bytes_accessed=4 * (b_pad * IN_FEATURES          # X
                            + IN_FEATURES * L            # W^T
                            + 2 * L                      # b, p
                            + b_pad * L * L),            # output
    )

    out = pl.pallas_call(
        tg_adapter_kernel,
        out_shape=jax.ShapeDtypeStruct((b_pad, L, L), jnp.float32),
        grid_spec=pltpu.PrefetchScalarGridSpec(
            num_scalar_prefetch=0,
            grid=grid,
            in_specs=[
                pl.BlockSpec((bt, IN_FEATURES), lambda i: (i, 0)),   # X chunk
                pl.BlockSpec((IN_FEATURES, L), lambda i: (0, 0)),    # W^T resident
                pl.BlockSpec((1, L), lambda i: (0, 0)),              # bias resident
                pl.BlockSpec((1, 1, L), lambda i: (0, 0, 0)),        # outer_param resident
            ],
            out_specs=pl.BlockSpec((bt, L, L), lambda i: (i, 0, 0)),
        ),
        compiler_params=pltpu.CompilerParams(
            dimension_semantics=("parallel",),
        ),
        cost_estimate=cost,
    )(xs, wt, b_row, p_row)

    out = out[:B]                           # drop padded instances
    return out.reshape(B, 1, 1, L, L)


def tg_adapter_forward(x, w, b, p):
    """Exact module semantics: x (1, 256) -> (1, 1, L, L)."""
    return tg_adapter_forward_batched(x, w, b, p)[0]


def reference_forward(x, w, b, p):
    """Pure-JAX reference mirroring the PyTorch module."""
    h = x[0] @ w.T + b                      # (L,)  -- nn.Linear
    outer = h[:, None] * p[None, :]         # (L, L) -- torch.outer
    L = w.shape[0]
    return jnp.maximum(outer, 0.0).reshape(1, 1, L, L)


if __name__ == "__main__":
    key = jax.random.PRNGKey(0)
    kx, kw, kb, kxs, kp = jax.random.split(key, 5)

    # Parameters, shapes per nn.Linear(256, length) (weight is (length, 256))
    # and nn.Parameter(torch.ones(length)).
    x = jax.random.normal(kx, (1, IN_FEATURES), dtype=jnp.float32)
    w = jax.random.normal(kw, (LENGTH, IN_FEATURES), dtype=jnp.float32) * 0.05
    b = jax.random.normal(kb, (LENGTH,), dtype=jnp.float32) * 0.05
    p_ones = jnp.ones((LENGTH,), dtype=jnp.float32)   # outer_param init = ones(length)

    # ---- exact module semantics: single instance ------------------------
    out1 = jax.block_until_ready(tg_adapter_forward(x, w, b, p_ones))
    ref1 = reference_forward(x, w, b, p_ones)
    assert out1.shape == (1, 1, LENGTH, LENGTH)
    assert jnp.allclose(out1, ref1, atol=1e-4, rtol=1e-4), "single-instance mismatch"

    # ---- batched path: many adapter evals in one pallas_call ------------
    # Non-trivial outer_param so a transposed outer product would be caught.
    B = 20
    xs = jax.random.normal(kxs, (B, IN_FEATURES), dtype=jnp.float32)
    p_rand = jax.random.normal(kp, (LENGTH,), dtype=jnp.float32)
    outs = jax.block_until_ready(
        tg_adapter_forward_batched(xs, w, b, p_rand, block_b=8))
    refs = jnp.stack(
        [reference_forward(xs[i:i + 1], w, b, p_rand) for i in range(B)])
    assert outs.shape == (B, 1, 1, LENGTH, LENGTH)
    assert jnp.allclose(outs, refs, atol=1e-4, rtol=1e-4), "batched mismatch"

    print("KERNEL_OK")
</pallas_src>

<mosaic_0001>
module attributes {stable_mosaic.version = 11 : i64} {
  func.func @tg_adapter_kernel(%arg0: i32, %arg1: memref<1x256xf32, #tpu.memory_space<vmem>>, %arg2: memref<256x128xf32, #tpu.memory_space<vmem>>, %arg3: memref<1x128xf32, #tpu.memory_space<vmem>>, %arg4: memref<1x1x128xf32, #tpu.memory_space<vmem>>, %arg5: memref<1x128x128xf32, #tpu.memory_space<vmem>>) attributes {dimension_semantics = [#tpu.dimension_semantics<parallel>], iteration_bounds = array<i64: 1>, scalar_prefetch = 0 : i64, scratch_operands = 0 : i64, tpu.core_type = #tpu.core_type<tc>, window_params = [{transform_indices = @transform_0, window_bounds = array<i64: 1, 256>}, {pipeline_mode = #tpu.pipeline_mode<synchronous>, transform_indices = @transform_1, window_bounds = array<i64: 256, 128>}, {pipeline_mode = #tpu.pipeline_mode<synchronous>, transform_indices = @transform_2, window_bounds = array<i64: 1, 128>}, {pipeline_mode = #tpu.pipeline_mode<synchronous>, transform_indices = @transform_3, window_bounds = array<i64: 1, 1, 128>}, {transform_indices = @transform_4, window_bounds = array<i64: 1, 128, 128>}]} {
    %c0 = arith.constant 0 : index
    %c0_0 = arith.constant 0 : index
    %0 = vector.load %arg1[%c0, %c0_0] : memref<1x256xf32, #tpu.memory_space<vmem>>, vector<1x256xf32>
    %c0_1 = arith.constant 0 : index
    %c0_2 = arith.constant 0 : index
    %1 = vector.load %arg2[%c0_1, %c0_2] : memref<256x128xf32, #tpu.memory_space<vmem>>, vector<256x128xf32>
    %cst = arith.constant dense<0.000000e+00> : vector<1x128xf32>
    %2 = tpu.matmul %0, %1, %cst {dimension_numbers = #tpu.dot_dimension_numbers<[1], [0], [0], [1], [0, 0, 1, 1], [], []>} : vector<1x256xf32>, vector<256x128xf32>, vector<1x128xf32> -> vector<1x128xf32>
    %c0_3 = arith.constant 0 : index
    %c0_4 = arith.constant 0 : index
    %3 = vector.load %arg3[%c0_3, %c0_4] : memref<1x128xf32, #tpu.memory_space<vmem>>, vector<1x128xf32>
    %4 = arith.addf %2, %3 : vector<1x128xf32>
    %5 = vector.shape_cast %4 : vector<1x128xf32> to vector<1x128x1xf32>
    %c0_5 = arith.constant 0 : index
    %c0_6 = arith.constant 0 : index
    %c0_7 = arith.constant 0 : index
    %6 = vector.load %arg4[%c0_5, %c0_6, %c0_7] : memref<1x1x128xf32, #tpu.memory_space<vmem>>, vector<1x1x128xf32>
    %7 = vector.broadcast %5 : vector<1x128x1xf32> to vector<1x128x128xf32>
    %8 = vector.broadcast %6 : vector<1x1x128xf32> to vector<1x128x128xf32>
    %9 = arith.mulf %7, %8 : vector<1x128x128xf32>
    %cst_8 = arith.constant 0.000000e+00 : f32
    %10 = vector.broadcast %cst_8 : f32 to vector<1x128x128xf32>
    %11 = arith.maximumf %9, %10 : vector<1x128x128xf32>
    %c0_9 = arith.constant 0 : index
    %c0_10 = arith.constant 0 : index
    %c0_11 = arith.constant 0 : index
    %12 = vector.load %arg5[%c0_9, %c0_10, %c0_11] : memref<1x128x128xf32, #tpu.memory_space<vmem>>, vector<1x128x128xf32>
    tpu.vector_store %arg5[%c0_9, %c0_10, %c0_11], %11 {strides = array<i32>} : memref<1x128x128xf32, #tpu.memory_space<vmem>>, vector<1x128x128xf32>,
    return
  }
  func.func @transform_0(%arg0: i32) -> (i32, i32) {
    %c0_i32 = arith.constant 0 : i32
    %c0_i32_0 = arith.constant 0 : i32
    return %arg0, %c0_i32 : i32, i32
  }
  func.func @transform_1(%arg0: i32) -> (i32, i32) {
    %c0_i32 = arith.constant 0 : i32
    %c0_i32_0 = arith.constant 0 : i32
    %c0_i32_1 = arith.constant 0 : i32
    return %c0_i32, %c0_i32_0 : i32, i32
  }
  func.func @transform_2(%arg0: i32) -> (i32, i32) {
    %c0_i32 = arith.constant 0 : i32
    %c0_i32_0 = arith.constant 0 : i32
    %c0_i32_1 = arith.constant 0 : i32
    return %c0_i32, %c0_i32_0 : i32, i32
  }
  func.func @transform_3(%arg0: i32) -> (i32, i32, i32) {
    %c0_i32 = arith.constant 0 : i32
    %c0_i32_0 = arith.constant 0 : i32
    %c0_i32_1 = arith.constant 0 : i32
    %c0_i32_2 = arith.constant 0 : i32
    return %c0_i32, %c0_i32_0, %c0_i32_1 : i32, i32, i32
  }
  func.func @transform_4(%arg0: i32) -> (i32, i32, i32) {
    %c0_i32 = arith.constant 0 : i32
    %c0_i32_0 = arith.constant 0 : i32
    %c0_i32_1 = arith.constant 0 : i32
    return %arg0, %c0_i32, %c0_i32_0 : i32, i32, i32
  }
}

</mosaic_0001>

<llo_original>
// kernel: tpu_custom_call.1
$region0: #{tpu_custom_call.1}
  #allocation0 [shape = 'u32[]', space=smem, size = 0x4, offset = 0x4, fixed_abs, tag = 'smem constant byte address 0x4 - core index']
  #allocation1 [shape = 'u32[144,128]{1,0:T(1,128)}', space=vmem, size = 0x12000, scoped, tag = 'internal scratch']
  %s0 = inlined_call_operand.hbm [shape: f32[1,256], index: 0, kind: input, shape index: {}]
  %s1 = inlined_call_operand.hbm [shape: f32[256,128], index: 1, kind: input, shape index: {}]
  %s2 = inlined_call_operand.vmem [shape: f32[1,128], index: 2, kind: input, shape index: {}]
  %s3 = inlined_call_operand.vmem [shape: f32[1,1,128], index: 3, kind: input, shape index: {}]
  %s4 = inlined_call_operand.hbm [shape: f32[1,128,128], index: 4, kind: output, shape index: {}]
  %s5 = sld [smem:[#allocation0]]
  $region34: #{tpu_custom_call.1} parent=0
    _
  %s7 = ssub.s32 1, %s5
  %s8 = scalar_select 0, %s7, %s5
  $region1: #{tpu_custom_call.1} parent=0
    #allocation2 [shape = 'u8[1024]{0}', space=vmem, size = 0x400, scoped, tag = 'input window, operand 0, single buffered']
    #allocation3 [shape = 's32[1]{0}', space=sflag, size = 0x4, scoped, tag = 'scoped memory for tpu_custom_call.1']
    #allocation4 [shape = 's32[1]{0}', space=sflag, size = 0x4, scoped, tag = 'scoped memory for tpu_custom_call.1']
    #allocation5 [shape = 'u8[131072]{0}', space=vmem, size = 0x20000, scoped, tag = 'input window, operand 1, single buffered']
    #allocation6 [shape = 's32[1]{0}', space=sflag, size = 0x4, scoped, tag = 'scoped memory for tpu_custom_call.1']
    #allocation7 [shape = 'u8[65536]{0}', space=vmem, size = 0x10000, scoped, tag = 'output window, operand 0, single buffered']
    %9 = vsyncpa [#allocation3], 0
    %10 = vsyncpa [#allocation6], 0
    %11 = vsyncpa [#allocation4], 0
    // Predicated region
    $region2: #{tpu_custom_call.1} parent=1 // pred_check
      _
    $region3: #{tpu_custom_call.1} parent=1 // pred_check_branch
      %13 = sbr.rel (0) target = $region5
    $region4: #{tpu_custom_call.1} parent=1 // pred_region
      %s15 = ssub.s32 32, 32
      %16 = vsyncadd [#allocation3], %s15
      %s18 = sshll.u32 [#allocation2], 4
      %s19 = int_to_ptr.vmem [resolvable:$true] %s18
      %21 = dma.hbm_to_vmem [thread:$0]  %s0, 32, %s19, [#allocation3]
    $region5: #{tpu_custom_call.1} parent=1 // pred_fallthru
      _
    // Predicated region
    $region6: #{tpu_custom_call.1} parent=1 // pred_check
      _
    $region7: #{tpu_custom_call.1} parent=1 // pred_check_branch
      %23 = sbr.rel (0) target = $region9
    $region8: #{tpu_custom_call.1} parent=1 // pred_region
      %s25 = ssub.s32 4096, 4096
      %26 = vsyncadd [#allocation6], %s25
      %s27 = sshll.u32 [#allocation5], 4
      %s28 = int_to_ptr.vmem [resolvable:$true] %s27
      %33 = dma.hbm_to_vmem [thread:$0]  %s1, 4096, %s28, [#allocation6], 128, 128, 8
    $region9: #{tpu_custom_call.1} parent=1 // pred_fallthru
      _
    // Predicated region
    $region10: #{tpu_custom_call.1} parent=1 // pred_check
      _
    $region11: #{tpu_custom_call.1} parent=1 // pred_check_branch
      %35 = sbr.rel (0) target = $region13
    $region12: #{tpu_custom_call.1} parent=1 // pred_region
      _
    $region13: #{tpu_custom_call.1} parent=1 // pred_fallthru
      _
    // Predicated region
    $region14: #{tpu_custom_call.1} parent=1 // pred_check
      _
    $region15: #{tpu_custom_call.1} parent=1 // pred_check_branch
      %37 = sbr.rel (0) target = $region17
    $region16: #{tpu_custom_call.1} parent=1 // pred_region
      _
    $region17: #{tpu_custom_call.1} parent=1 // pred_fallthru
      _
    // Predicated region
    $region18: #{tpu_custom_call.1} parent=1 // pred_check
      _
    $region19: #{tpu_custom_call.1} parent=1 // pred_check_branch
      %39 = sbr.rel (0) target = $region21
    $region20: #{tpu_custom_call.1} parent=1 // pred_region
      %40 = dma.done [#allocation3], 32
    $region21: #{tpu_custom_call.1} parent=1 // pred_fallthru
      _
    // Predicated region
    $region22: #{tpu_custom_call.1} parent=1 // pred_check
      _
    $region23: #{tpu_custom_call.1} parent=1 // pred_check_branch
      %42 = sbr.rel (0) target = $region25
    $region24: #{tpu_custom_call.1} parent=1 // pred_region
      %43 = dma.done [#allocation6], 4096
    $region25: #{tpu_custom_call.1} parent=1 // pred_fallthru
      _
    %v44 = vld [vmem:[#allocation2] sm:$0x3]
    %v45 = vld [vmem:[#allocation5] sm:$0xff]
    %v46 = vld [vmem:[#allocation5 + $0x8] sm:$0xff]
    %v47 = vld [vmem:[#allocation5 + $0x10] sm:$0xff]
    %v48 = vld [vmem:[#allocation5 + $0x18] sm:$0xff]
    %v49 = vld [vmem:[#allocation5 + $0x20] sm:$0xff]
    %v50 = vld [vmem:[#allocation5 + $0x28] sm:$0xff]
    %v51 = vld [vmem:[#allocation5 + $0x30] sm:$0xff]
    %v52 = vld [vmem:[#allocation5 + $0x38] sm:$0xff]
    %v53 = vld [vmem:[#allocation5 + $0x40] sm:$0xff]
    %v54 = vld [vmem:[#allocation5 + $0x48] sm:$0xff]
    %v55 = vld [vmem:[#allocation5 + $0x50] sm:$0xff]
    %v56 = vld [vmem:[#allocation5 + $0x58] sm:$0xff]
    %v57 = vld [vmem:[#allocation5 + $0x60] sm:$0xff]
    %v58 = vld [vmem:[#allocation5 + $0x68] sm:$0xff]
    %v59 = vld [vmem:[#allocation5 + $0x70] sm:$0xff]
    %v60 = vld [vmem:[#allocation5 + $0x78] sm:$0xff]
    %v61 = vld [vmem:[#allocation5 + $0x80] sm:$0xff]
    %v62 = vld [vmem:[#allocation5 + $0x88] sm:$0xff]
    %v63 = vld [vmem:[#allocation5 + $0x90] sm:$0xff]
    %v64 = vld [vmem:[#allocation5 + $0x98] sm:$0xff]
    %v65 = vld [vmem:[#allocation5 + $0xa0] sm:$0xff]
    %v66 = vld [vmem:[#allocation5 + $0xa8] sm:$0xff]
    %v67 = vld [vmem:[#allocation5 + $0xb0] sm:$0xff]
    %v68 = vld [vmem:[#allocation5 + $0xb8] sm:$0xff]
    %v69 = vld [vmem:[#allocation5 + $0xc0] sm:$0xff]
    %v70 = vld [vmem:[#allocation5 + $0xc8] sm:$0xff]
    %v71 = vld [vmem:[#allocation5 + $0xd0] sm:$0xff]
    %v72 = vld [vmem:[#allocation5 + $0xd8] sm:$0xff]
    %v73 = vld [vmem:[#allocation5 + $0xe0] sm:$0xff]
    %v74 = vld [vmem:[#allocation5 + $0xe8] sm:$0xff]
    %v75 = vld [vmem:[#allocation5 + $0xf0] sm:$0xff]
    %v76 = vld [vmem:[#allocation5 + $0xf8] sm:$0xff]
    %v77 = vld [vmem:[%s2] sm:$0x1]
    %v79 = vlaneseq
    %v80 = vshrl.u32 %v79, 7
    %v81 = vsub.s32 0, %v80
    %v82 = vrot.slane %v44, %v81
    %v83 = vlaneseq
    %v84 = vshrl.u32 %v83, 7
    %v85 = vsub.s32 1, %v84
    %v86 = vrot.slane %v44, %v85
    %89 = vmatprep.subr.mxu0 0.0
    %90 = vmatpush1.msra.mxu0 %v60
    %91 = vmatprep.subr.mxu0 0.0
    %92 = vmatpush1.msra.mxu0 %v59
    %93 = vmatprep.subr.mxu0 0.0
    %94 = vmatpush1.msra.mxu0 %v58
    %95 = vmatprep.subr.mxu0 0.0
    %96 = vmatpush1.msra.mxu0 %v57
    %97 = vmatprep.subr.mxu0 0.0
    %98 = vmatpush1.msra.mxu0 %v56
    %99 = vmatprep.subr.mxu0 0.0
    %100 = vmatpush1.msra.mxu0 %v55
    %101 = vmatprep.subr.mxu0 0.0
    %102 = vmatpush1.msra.mxu0 %v54
    %103 = vmatprep.subr.mxu0 0.0
    %104 = vmatpush1.msra.mxu0 %v53
    %105 = vmatprep.subr.mxu0 0.0
    %106 = vmatpush1.msra.mxu0 %v52
    %107 = vmatprep.subr.mxu0 0.0
    %108 = vmatpush1.msra.mxu0 %v51
    %109 = vmatprep.subr.mxu0 0.0
    %110 = vmatpush1.msra.mxu0 %v50
    %111 = vmatprep.subr.mxu0 0.0
    %112 = vmatpush1.msra.mxu0 %v49
    %113 = vmatprep.subr.mxu0 0.0
    %114 = vmatpush1.msra.mxu0 %v48
    %115 = vmatprep.subr.mxu0 0.0
    %116 = vmatpush1.msra.mxu0 %v47
    %117 = vmatprep.subr.mxu0 0.0
    %118 = vmatpush1.msra.mxu0 %v46
    %119 = vmatprep.subr.mxu0 0.0
    %120 = vmatpush1.msra.mxu0 %v45
    %121 = vmatprep.subr.mxu0 0.0
    %122 = vmatpush2.msra.mxu0 %v76
    %123 = vmatprep.subr.mxu0 0.0
    %124 = vmatpush2.msra.mxu0 %v75
    %125 = vmatprep.subr.mxu0 0.0
    %126 = vmatpush2.msra.mxu0 %v74
    %127 = vmatprep.subr.mxu0 0.0
    %128 = vmatpush2.msra.mxu0 %v73
    %129 = vmatprep.subr.mxu0 0.0
    %130 = vmatpush2.msra.mxu0 %v72
    %131 = vmatprep.subr.mxu0 0.0
    %132 = vmatpush2.msra.mxu0 %v71
    %133 = vmatprep.subr.mxu0 0.0
    %134 = vmatpush2.msra.mxu0 %v70
    %135 = vmatprep.subr.mxu0 0.0
    %136 = vmatpush2.msra.mxu0 %v69
    %137 = vmatprep.subr.mxu0 0.0
    %138 = vmatpush2.msra.mxu0 %v68
    %139 = vmatprep.subr.mxu0 0.0
    %140 = vmatpush2.msra.mxu0 %v67
    %141 = vmatprep.subr.mxu0 0.0
    %142 = vmatpush2.msra.mxu0 %v66
    %143 = vmatprep.subr.mxu0 0.0
    %144 = vmatpush2.msra.mxu0 %v65
    %145 = vmatprep.subr.mxu0 0.0
    %146 = vmatpush2.msra.mxu0 %v64
    %147 = vmatprep.subr.mxu0 0.0
    %148 = vmatpush2.msra.mxu0 %v63
    %149 = vmatprep.subr.mxu0 0.0
    %150 = vmatpush2.msra.mxu0 %v62
    %151 = vmatprep.subr.mxu0 0.0
    %152 = vmatpush2.msra.mxu0 %v61
    %153 = vmatprep.mubr.f32.mxu0 %v86
    %154 = vmatmul.mubr.f32.gmra.mxu0 %v82
    %v155 = vpop.f32.mrf.mxu0
    %v156 = vadd.f32 %v77, %v155
    %v157 = vpop.f32.mrf.mxu0
    %158 = vdwg.mxu0
    %v159 = vlaneseq
    %v160 = vshrl.u32 %v159, 7
    %v161 = vsub.s32 0, %v160
    %v162 = vrot.slane %v156, %v161
    %164 = vbcast.lane.b32.xlu0 %v162, 256
    %v165 = vpop.permute.xlu0 %164
    %s167 = sor.u32 256, 8
    %168 = vbcast.lane.b32.xlu0 %v162, %s167
    %v169 = vpop.permute.xlu0 %168
    %s171 = sor.u32 256, 16
    %172 = vbcast.lane.b32.xlu0 %v162, %s171
    %v173 = vpop.permute.xlu0 %172
    %s175 = sor.u32 256, 24
    %176 = vbcast.lane.b32.xlu0 %v162, %s175
    %v177 = vpop.permute.xlu0 %176
    %s179 = sor.u32 256, 32
    %180 = vbcast.lane.b32.xlu0 %v162, %s179
    %v181 = vpop.permute.xlu0 %180
    %s183 = sor.u32 256, 40
    %184 = vbcast.lane.b32.xlu0 %v162, %s183
    %v185 = vpop.permute.xlu0 %184
    %s187 = sor.u32 256, 48
    %188 = vbcast.lane.b32.xlu0 %v162, %s187
    %v189 = vpop.permute.xlu0 %188
    %s191 = sor.u32 256, 56
    %192 = vbcast.lane.b32.xlu0 %v162, %s191
    %v193 = vpop.permute.xlu0 %192
    %s195 = sor.u32 256, 64
    %196 = vbcast.lane.b32.xlu0 %v162, %s195
    %v197 = vpop.permute.xlu0 %196
    %s199 = sor.u32 256, 72
    %200 = vbcast.lane.b32.xlu0 %v162, %s199
    %v201 = vpop.permute.xlu0 %200
    %s203 = sor.u32 256, 80
    %204 = vbcast.lane.b32.xlu0 %v162, %s203
    %v205 = vpop.permute.xlu0 %204
    %s207 = sor.u32 256, 88
    %208 = vbcast.lane.b32.xlu0 %v162, %s207
    %v209 = vpop.permute.xlu0 %208
    %s211 = sor.u32 256, 96
    %212 = vbcast.lane.b32.xlu0 %v162, %s211
    %v213 = vpop.permute.xlu0 %212
    %s215 = sor.u32 256, 104
    %216 = vbcast.lane.b32.xlu0 %v162, %s215
    %v217 = vpop.permute.xlu0 %216
    %s219 = sor.u32 256, 112
    %220 = vbcast.lane.b32.xlu0 %v162, %s219
    %v221 = vpop.permute.xlu0 %220
    %s223 = sor.u32 256, 120
    %224 = vbcast.lane.b32.xlu0 %v162, %s223
    %v225 = vpop.permute.xlu0 %224
    %v226 = vld [vmem:[%s3] sm:$0x1]
    %v228 = vlaneseq
    %v229 = vshrl.u32 %v228, 7
    %v230 = vsub.s32 0, %v229
    %v231 = vrot.slane %v226, %v230
    %v233 = vmul.f32 %v165, %v231
    %v234 = vmul.f32 %v169, %v231
    %v235 = vmul.f32 %v173, %v231
    %v236 = vmul.f32 %v177, %v231
    %v237 = vmul.f32 %v181, %v231
    %v238 = vmul.f32 %v185, %v231
    %v239 = vmul.f32 %v189, %v231
    %v240 = vmul.f32 %v193, %v231
    %v241 = vmul.f32 %v197, %v231
    %v242 = vmul.f32 %v201, %v231
    %v243 = vmul.f32 %v205, %v231
    %v244 = vmul.f32 %v209, %v231
    %v245 = vmul.f32 %v213, %v231
    %v246 = vmul.f32 %v217, %v231
    %v247 = vmul.f32 %v221, %v231
    %v248 = vmul.f32 %v225, %v231
    %v249 = vmax.f32 %v233, 0.0
    %v250 = vmax.f32 %v234, 0.0
    %v251 = vmax.f32 %v235, 0.0
    %v252 = vmax.f32 %v236, 0.0
    %v253 = vmax.f32 %v237, 0.0
    %v254 = vmax.f32 %v238, 0.0
    %v255 = vmax.f32 %v239, 0.0
    %v256 = vmax.f32 %v240, 0.0
    %v257 = vmax.f32 %v241, 0.0
    %v258 = vmax.f32 %v242, 0.0
    %v259 = vmax.f32 %v243, 0.0
    %v260 = vmax.f32 %v244, 0.0
    %v261 = vmax.f32 %v245, 0.0
    %v262 = vmax.f32 %v246, 0.0
    %v263 = vmax.f32 %v247, 0.0
    %v264 = vmax.f32 %v248, 0.0
    %265 = vst [vmem:[#allocation7] sm:$0xff] %v249
    %266 = vst [vmem:[#allocation7 + $0x8] sm:$0xff] %v250
    %267 = vst [vmem:[#allocation7 + $0x10] sm:$0xff] %v251
    %268 = vst [vmem:[#allocation7 + $0x18] sm:$0xff] %v252
    %269 = vst [vmem:[#allocation7 + $0x20] sm:$0xff] %v253
    %270 = vst [vmem:[#allocation7 + $0x28] sm:$0xff] %v254
    %271 = vst [vmem:[#allocation7 + $0x30] sm:$0xff] %v255
    %272 = vst [vmem:[#allocation7 + $0x38] sm:$0xff] %v256
    %273 = vst [vmem:[#allocation7 + $0x40] sm:$0xff] %v257
    %274 = vst [vmem:[#allocation7 + $0x48] sm:$0xff] %v258
    %275 = vst [vmem:[#allocation7 + $0x50] sm:$0xff] %v259
    %276 = vst [vmem:[#allocation7 + $0x58] sm:$0xff] %v260
    %277 = vst [vmem:[#allocation7 + $0x60] sm:$0xff] %v261
    %278 = vst [vmem:[#allocation7 + $0x68] sm:$0xff] %v262
    %279 = vst [vmem:[#allocation7 + $0x70] sm:$0xff] %v263
    %280 = vst [vmem:[#allocation7 + $0x78] sm:$0xff] %v264
    // Predicated region
    $region26: #{tpu_custom_call.1} parent=1 // pred_check
      _
    $region27: #{tpu_custom_call.1} parent=1 // pred_check_branch
      %282 = sbr.rel (0) target = $region29
    $region28: #{tpu_custom_call.1} parent=1 // pred_region
      %s284 = ssub.s32 2048, 2048
      %285 = vsyncadd [#allocation4], %s284
      %s286 = sshll.u32 [#allocation7], 4
      %s287 = int_to_ptr.vmem [resolvable:$true] %s286
      %292 = dma.vmem_to_hbm [thread:$0]  %s287, 2048, %s4, [#allocation4], 128, 128, 8
    $region29: #{tpu_custom_call.1} parent=1 // pred_fallthru
      _
    // Predicated region
    $region30: #{tpu_custom_call.1} parent=1 // pred_check
      _
    $region31: #{tpu_custom_call.1} parent=1 // pred_check_branch
      %294 = sbr.rel (0) target = $region33
    $region32: #{tpu_custom_call.1} parent=1 // pred_region
      %295 = dma.done [#allocation4], 2048
    $region33: #{tpu_custom_call.1} parent=1 // pred_fallthru
      _
    %296 = vsyncpa [#allocation3], 1
    %297 = vsyncpa [#allocation6], 1
    %298 = vsyncpa [#allocation4], 1

</llo_original>
